<compile_context>
chip_gen: v7x
topology: tpu7x:2x2x1
jax: 0.10.0
libtpu: 0.0.40
codegen_flags: <defaults>
</compile_context>

<pallas_src>
import jax
import jax.numpy as jnp
from jax.experimental import pallas as pl
from jax.experimental.pallas import tpu as pltpu


def _copy_kernel(emb_ref, out_ref):
    # Straight copy of the current VMEM tile: parameter -> output.
    out_ref[...] = emb_ref[...]


# Rows per tile for the large-embedding path.  Double-buffered input + output
# at (1024, 128) f32 is ~2 MiB of VMEM — far under the 32 MiB default scoped
# limit on v5e/v6e/v7x, yet large enough (>=512 rows) to sit near the measured
# ~85% of HBM copy roofline.
_TILE_ROWS = 1024


def program_embeddings_forward(embedding: jax.Array, program_i: int) -> jax.Array:
    """Forward pass of ProgramEmbeddings.

    `program_i` is ignored, exactly as in the PyTorch module.
    """
    del program_i  # unused, matching the reference semantics

    n, h = embedding.shape
    total = n * h
    itemsize = jnp.dtype(embedding.dtype).itemsize
    cost = pl.CostEstimate(
        flops=0, transcendentals=0, bytes_accessed=2 * total * itemsize
    )

    if total % 128 == 0:
        # Lane-dense path: present the data as (rows, 128) so the copy moves
        # in full vreg-width vld/vst pairs.
        rows = total // 128
        flat = embedding.reshape(rows, 128)

        if rows <= _TILE_ROWS:
            # Small tensor (the toy module's case): single full block, no
            # grid, no pipelining, no prefetch machinery.
            out_flat = pl.pallas_call(
                _copy_kernel,
                out_shape=jax.ShapeDtypeStruct((rows, 128), embedding.dtype),
                cost_estimate=cost,
            )(flat)
        else:
            # Large tensor: pure copy is HBM-bandwidth bound -> tile over rows
            # and let the row axis shard across TensorCores where available.
            grid = (pl.cdiv(rows, _TILE_ROWS),)
            out_flat = pl.pallas_call(
                _copy_kernel,
                out_shape=jax.ShapeDtypeStruct((rows, 128), embedding.dtype),
                grid=grid,
                in_specs=[pl.BlockSpec((_TILE_ROWS, 128), lambda i: (i, 0))],
                out_specs=pl.BlockSpec((_TILE_ROWS, 128), lambda i: (i, 0)),
                compiler_params=pltpu.CompilerParams(
                    dimension_semantics=("parallel",)
                ),
                cost_estimate=cost,
            )(flat)

        return out_flat.reshape(n, h)

    # Fallback (n*h not a multiple of 128): whole-array copy, no grid.
    return pl.pallas_call(
        _copy_kernel,
        out_shape=jax.ShapeDtypeStruct((n, h), embedding.dtype),
        cost_estimate=cost,
    )(embedding)


if __name__ == "__main__":
    # Deterministic parameter init (the module's __init__ wraps a provided
    # tensor as nn.Parameter; here we synthesize it in-script).
    num_programs = 8   # "seq"-like axis
    hidden = 32        # embedding width
    key = jax.random.PRNGKey(0)
    embedding = jax.random.normal(key, (num_programs, hidden), dtype=jnp.float32)

    out = program_embeddings_forward(embedding, program_i=3)
    out = jax.block_until_ready(out)

    # Correctness: forward must return the embedding unchanged.
    assert out.shape == embedding.shape
    assert out.dtype == embedding.dtype
    assert bool(jnp.array_equal(out, embedding))

    print("KERNEL_OK")
</pallas_src>

<mosaic_0001>
module attributes {stable_mosaic.version = 11 : i64} {
  func.func @_copy_kernel(%arg0: memref<2x128xf32, #tpu.memory_space<vmem>>, %arg1: memref<2x128xf32, #tpu.memory_space<vmem>>) attributes {dimension_semantics = [], scalar_prefetch = 0 : i64, scratch_operands = 0 : i64, tpu.core_type = #tpu.core_type<tc>} {
    %c0 = arith.constant 0 : index
    %c0_0 = arith.constant 0 : index
    %0 = vector.load %arg0[%c0, %c0_0] : memref<2x128xf32, #tpu.memory_space<vmem>>, vector<2x128xf32>
    %c0_1 = arith.constant 0 : index
    %c0_2 = arith.constant 0 : index
    %1 = vector.load %arg1[%c0_1, %c0_2] : memref<2x128xf32, #tpu.memory_space<vmem>>, vector<2x128xf32>
    tpu.vector_store %arg1[%c0_1, %c0_2], %0 {strides = array<i32>} : memref<2x128xf32, #tpu.memory_space<vmem>>, vector<2x128xf32>,
    return
  }
}

</mosaic_0001>

<llo_original>
// kernel: tpu_custom_call.1
$region0: #{tpu_custom_call.1}
  #allocation0 [shape = 'u32[]', space=smem, size = 0x4, offset = 0x4, fixed_abs, tag = 'smem constant byte address 0x4 - core index']
  #allocation1 [shape = 'u32[144,128]{1,0:T(1,128)}', space=vmem, size = 0x12000, scoped, tag = 'internal scratch']
  %s0 = inlined_call_operand.hbm [shape: f32[2,128], index: 0, kind: input, shape index: {}]
  %s1 = inlined_call_operand.hbm [shape: f32[2,128], index: 1, kind: output, shape index: {}]
  %s2 = sld [smem:[#allocation0]]
  $region18: #{tpu_custom_call.1} parent=0
    _
  %s4 = ssub.s32 1, %s2
  %s5 = scalar_select 0, %s4, %s2
  $region1: #{tpu_custom_call.1} parent=0
    #allocation2 [shape = 'u8[1024]{0}', space=vmem, size = 0x400, scoped, tag = 'input window, operand 0, single buffered']
    #allocation3 [shape = 's32[1]{0}', space=sflag, size = 0x4, scoped, tag = 'scoped memory for tpu_custom_call.1']
    #allocation4 [shape = 's32[1]{0}', space=sflag, size = 0x4, scoped, tag = 'scoped memory for tpu_custom_call.1']
    #allocation5 [shape = 'u8[1024]{0}', space=vmem, size = 0x400, scoped, tag = 'output window, operand 0, single buffered']
    %6 = vsyncpa [#allocation3], 0
    %7 = vsyncpa [#allocation4], 0
    // Predicated region
    $region2: #{tpu_custom_call.1} parent=1 // pred_check
      _
    $region3: #{tpu_custom_call.1} parent=1 // pred_check_branch
      %9 = sbr.rel (0) target = $region5
    $region4: #{tpu_custom_call.1} parent=1 // pred_region
      %s11 = ssub.s32 32, 32
      %12 = vsyncadd [#allocation3], %s11
      %s14 = sshll.u32 [#allocation2], 4
      %s15 = int_to_ptr.vmem [resolvable:$true] %s14
      %17 = dma.hbm_to_vmem [thread:$0]  %s0, 32, %s15, [#allocation3]
    $region5: #{tpu_custom_call.1} parent=1 // pred_fallthru
      _
    // Predicated region
    $region6: #{tpu_custom_call.1} parent=1 // pred_check
      _
    $region7: #{tpu_custom_call.1} parent=1 // pred_check_branch
      %19 = sbr.rel (0) target = $region9
    $region8: #{tpu_custom_call.1} parent=1 // pred_region
      %20 = dma.done [#allocation3], 32
    $region9: #{tpu_custom_call.1} parent=1 // pred_fallthru
      _
    %v21 = vld [vmem:[#allocation2] sm:$0x3]
    %22 = vst [vmem:[#allocation5] sm:$0x3] %v21
    // Predicated region
    $region10: #{tpu_custom_call.1} parent=1 // pred_check
      _
    $region11: #{tpu_custom_call.1} parent=1 // pred_check_branch
      %24 = sbr.rel (0) target = $region13
    $region12: #{tpu_custom_call.1} parent=1 // pred_region
      %s26 = ssub.s32 32, 32
      %27 = vsyncadd [#allocation4], %s26
      %s29 = sshll.u32 [#allocation5], 4
      %s30 = int_to_ptr.vmem [resolvable:$true] %s29
      %32 = dma.vmem_to_hbm [thread:$0]  %s30, 32, %s1, [#allocation4]
    $region13: #{tpu_custom_call.1} parent=1 // pred_fallthru
      _
    // Predicated region
    $region14: #{tpu_custom_call.1} parent=1 // pred_check
      _
    $region15: #{tpu_custom_call.1} parent=1 // pred_check_branch
      %34 = sbr.rel (0) target = $region17
    $region16: #{tpu_custom_call.1} parent=1 // pred_region
      %35 = dma.done [#allocation4], 32
    $region17: #{tpu_custom_call.1} parent=1 // pred_fallthru
      _
    %36 = vsyncpa [#allocation3], 1
    %37 = vsyncpa [#allocation4], 1

</llo_original>
